<compile_context>
chip_gen: v7x
topology: tpu7x:2x2x1
jax: 0.10.0
libtpu: 0.0.40
codegen_flags: <defaults>
</compile_context>

<pallas_src>
import functools
from typing import NamedTuple

import jax
import jax.numpy as jnp
from jax.experimental import pallas as pl
from jax.experimental.pallas import tpu as pltpu

LANES = 128      # lane width of a vreg / last-dim tile
SUBLANES = 8     # sublane count / second-to-last-dim tile


def _round_up(n, m):
    return ((n + m - 1) // m) * m


class CriticMeta(NamedTuple):
    in_size: int
    in_rows: int
    h1: int
    h1_rows: int
    h2: int
    h2_rows: int


# ---------------------------------------------------------------------------
# Parameter packing: one zero-padded (rows, 128) f32 slab, transposed layout.
#   rows [0, h1_rows)                : W1^T  (h1 rows, in_size cols live)
#   rows [h1_rows, h1_rows+h2_rows)  : W2^T  (h2 rows, h1 cols live)
#   rows [rv, rv+vec_rows)           : column panel:
#       col 0 : b1   (h1 rows live)
#       col 1 : b2   (h2 rows live)
#       col 2 : W3   (h2 rows live)
#       col 3 : b3   (row 0)
# Zero padding keeps padded sublanes exactly 0 through tanh, so padded matmuls
# are bit-identical to the reference on live rows.
# ---------------------------------------------------------------------------
def pack_params(params):
    w1, b1 = params["w1"], params["b1"]          # (in, H1), (1, H1)
    w2, b2 = params["w2"], params["b2"]          # (H1, H2), (1, H2)
    w3, b3 = params["w3"], params["b3"]          # (H2, 1),  (1, 1)
    in_size, h1 = w1.shape
    h2 = w2.shape[1]
    assert in_size <= LANES and h1 <= LANES and h2 <= LANES, \
        "packed kernel supports feature/hidden widths <= 128"

    in_rows = _round_up(max(in_size, 1), SUBLANES)
    h1_rows = _round_up(h1, SUBLANES)
    h2_rows = _round_up(h2, SUBLANES)
    vec_rows = max(h1_rows, h2_rows)
    rows = h1_rows + h2_rows + vec_rows
    rv = h1_rows + h2_rows

    slab = jnp.zeros((rows, LANES), jnp.float32)
    slab = slab.at[0:h1, 0:in_size].set(w1.T.astype(jnp.float32))
    slab = slab.at[h1_rows:h1_rows + h2, 0:h1].set(w2.T.astype(jnp.float32))
    slab = slab.at[rv:rv + h1, 0].set(b1.reshape(-1).astype(jnp.float32))
    slab = slab.at[rv:rv + h2, 1].set(b2.reshape(-1).astype(jnp.float32))
    slab = slab.at[rv:rv + h2, 2].set(w3.reshape(-1).astype(jnp.float32))
    slab = slab.at[rv, 3].set(b3.astype(jnp.float32).reshape(()))

    meta = CriticMeta(in_size=in_size, in_rows=in_rows,
                      h1=h1, h1_rows=h1_rows, h2=h2, h2_rows=h2_rows)
    return slab, meta


# ---------------------------------------------------------------------------
# Kernel: one batch tile x^T (in_rows, TB) -> (8, TB) lane-dense value tile.
# ---------------------------------------------------------------------------
def _critic_kernel(x_ref, p_ref, o_ref, *, in_rows, h1_rows, h2_rows):
    xt = x_ref[...]                                        # (in_rows, TB) f32

    w1t = p_ref[0:h1_rows, 0:in_rows]                      # (h1_rows, in_rows)
    w2t = p_ref[h1_rows:h1_rows + h2_rows, 0:h1_rows]      # (h2_rows, h1_rows)
    rv = h1_rows + h2_rows
    b1 = p_ref[rv:rv + h1_rows, 0:1]                       # (h1_rows, 1)
    b2 = p_ref[rv:rv + h2_rows, 1:2]                       # (h2_rows, 1)
    w3 = p_ref[rv:rv + h2_rows, 2:3]                       # (h2_rows, 1)
    b3 = p_ref[rv:rv + 1, 3:4]                             # (1, 1)

    # layer 1: h^T = tanh(W1^T @ x^T + b1)   (padded rows stay exactly 0)
    h = jnp.tanh(jnp.dot(w1t, xt, preferred_element_type=jnp.float32) + b1)
    # layer 2: h^T = tanh(W2^T @ h^T + b2)   (K = h1_rows, not 128)
    h = jnp.tanh(jnp.dot(w2t, h, preferred_element_type=jnp.float32) + b2)
    # output layer: 1-wide projection on VPU + XLU sublane reduce
    v = jnp.sum(w3 * h, axis=0, keepdims=True) + b3        # (1, TB)
    # lane-dense unmasked store: value replicated over the 8 sublanes
    o_ref[...] = jnp.broadcast_to(v, o_ref.shape)


# ---------------------------------------------------------------------------
# Wrapper: one pad+transpose pass over x, 1-D "parallel" batch-on-lanes grid.
# ---------------------------------------------------------------------------
def critic_forward(x, slab, *, meta, block_b=8192, num_cores=1):
    """x: (B, in_size); (slab, meta) = pack_params(params). Returns (B, 1)."""
    B = x.shape[0]
    assert x.shape[1] == meta.in_size

    # Batch tile (lane dim): collapse the grid to 1 step for typical batches;
    # num_cores>1 (v7x megacore) splits the batch into >= num_cores tiles.
    tb = _round_up(min(block_b, max(B, 1)), LANES)
    if num_cores > 1:
        per_core = -(-_round_up(B, LANES) // num_cores)
        tb = min(tb, _round_up(per_core, LANES))
    b_pad = _round_up(B, tb)

    # Single cheap pad + transpose pass: batch goes onto lanes.
    x_t = jnp.pad(x.astype(jnp.float32).T,
                  ((0, meta.in_rows - meta.in_size), (0, b_pad - B)))

    kernel = functools.partial(_critic_kernel, in_rows=meta.in_rows,
                               h1_rows=meta.h1_rows, h2_rows=meta.h2_rows)

    out = pl.pallas_call(
        kernel,
        out_shape=jax.ShapeDtypeStruct((SUBLANES, b_pad), jnp.float32),
        grid=(b_pad // tb,),
        in_specs=[
            pl.BlockSpec((meta.in_rows, tb), lambda i: (0, i)),   # x^T tile
            pl.BlockSpec(slab.shape, lambda i: (0, 0)),           # params (resident)
        ],
        out_specs=pl.BlockSpec((SUBLANES, tb), lambda i: (0, i)),
        compiler_params=pltpu.CompilerParams(
            dimension_semantics=("parallel",)),
    )(x_t, slab)

    return out[0, :B].reshape(B, 1)


# ---------------------------------------------------------------------------
# Init + pure-JAX reference (mirrors NN.forward) for validation.
# ---------------------------------------------------------------------------
def init_params(key, in_size, layers):
    sizes = [in_size] + list(layers) + [1]
    params = {}
    ks = jax.random.split(key, 2 * (len(sizes) - 1))
    for i in range(len(sizes) - 1):
        fan_in, fan_out = sizes[i], sizes[i + 1]
        bound = 1.0 / jnp.sqrt(jnp.float32(fan_in))
        params[f"w{i+1}"] = jax.random.uniform(
            ks[2 * i], (fan_in, fan_out), jnp.float32, minval=-bound, maxval=bound)
        params[f"b{i+1}"] = jax.random.uniform(
            ks[2 * i + 1], (1, fan_out), jnp.float32, minval=-bound, maxval=bound)
    return params


def critic_reference(x, params):
    h = jnp.tanh(x @ params["w1"] + params["b1"])
    h = jnp.tanh(h @ params["w2"] + params["b2"])
    return h @ params["w3"] + params["b3"]


if __name__ == "__main__":
    key = jax.random.PRNGKey(0)
    k_x, k_p, k_x2 = jax.random.split(key, 3)

    in_size = 4                   # CartPole-like state dim
    hidden_layers = [32, 32]
    params = init_params(k_p, in_size, hidden_layers)
    slab, meta = pack_params(params)    # packed once, reused across calls

    fwd = jax.jit(critic_forward,
                  static_argnames=("meta", "block_b", "num_cores"))

    # Small RL-style batch (grid = 1 step).
    batch = 8
    x = jax.random.normal(k_x, (batch, in_size), jnp.float32)
    out = jax.block_until_ready(fwd(x, slab, meta=meta))
    ref = critic_reference(x, params)
    assert out.shape == (batch, 1)
    assert jnp.allclose(out, ref, atol=1e-5, rtol=1e-5)

    # Larger batch exercising padding + multi-tile grid.
    batch2 = 300
    x2 = jax.random.normal(k_x2, (batch2, in_size), jnp.float32)
    out2 = jax.block_until_ready(fwd(x2, slab, meta=meta, block_b=128))
    ref2 = critic_reference(x2, params)
    assert out2.shape == (batch2, 1)
    assert jnp.allclose(out2, ref2, atol=1e-5, rtol=1e-5)

    # Exercise the v7x-style >=2-tile megacore split.
    out3 = jax.block_until_ready(fwd(x2, slab, meta=meta, num_cores=2))
    assert jnp.allclose(out3, ref2, atol=1e-5, rtol=1e-5)

    print("KERNEL_OK")
</pallas_src>

<mosaic_0001>
module attributes {stable_mosaic.version = 11 : i64} {
  func.func @_critic_kernel(%arg0: i32, %arg1: memref<8x128xf32, #tpu.memory_space<vmem>>, %arg2: memref<96x128xf32, #tpu.memory_space<vmem>>, %arg3: memref<8x128xf32, #tpu.memory_space<vmem>>) attributes {dimension_semantics = [#tpu.dimension_semantics<parallel>], iteration_bounds = array<i64: 1>, scalar_prefetch = 0 : i64, scratch_operands = 0 : i64, tpu.core_type = #tpu.core_type<tc>, window_params = [{transform_indices = @transform_0, window_bounds = array<i64: 8, 128>}, {pipeline_mode = #tpu.pipeline_mode<synchronous>, transform_indices = @transform_1, window_bounds = array<i64: 96, 128>}, {transform_indices = @transform_2, window_bounds = array<i64: 8, 128>}]} {
    %c0 = arith.constant 0 : index
    %c0_0 = arith.constant 0 : index
    %0 = vector.load %arg1[%c0, %c0_0] : memref<8x128xf32, #tpu.memory_space<vmem>>, vector<8x128xf32>
    %c0_1 = arith.constant 0 : index
    %c0_2 = arith.constant 0 : index
    %1 = vector.load %arg2[%c0_1, %c0_2] : memref<96x128xf32, #tpu.memory_space<vmem>>, vector<32x8xf32>
    %c32 = arith.constant 32 : index
    %c0_3 = arith.constant 0 : index
    %2 = vector.load %arg2[%c32, %c0_3] : memref<96x128xf32, #tpu.memory_space<vmem>>, vector<32x32xf32>
    %c64 = arith.constant 64 : index
    %c0_4 = arith.constant 0 : index
    %3 = vector.load %arg2[%c64, %c0_4] : memref<96x128xf32, #tpu.memory_space<vmem>>, vector<32x1xf32>
    %c64_5 = arith.constant 64 : index
    %c1 = arith.constant 1 : index
    %4 = vector.load %arg2[%c64_5, %c1] : memref<96x128xf32, #tpu.memory_space<vmem>>, vector<32x1xf32>
    %c64_6 = arith.constant 64 : index
    %c2 = arith.constant 2 : index
    %5 = vector.load %arg2[%c64_6, %c2] : memref<96x128xf32, #tpu.memory_space<vmem>>, vector<32x1xf32>
    %c64_7 = arith.constant 64 : index
    %c3 = arith.constant 3 : index
    %6 = vector.load %arg2[%c64_7, %c3] : memref<96x128xf32, #tpu.memory_space<vmem>>, vector<1x1xf32>
    %cst = arith.constant dense<0.000000e+00> : vector<32x128xf32>
    %7 = tpu.matmul %1, %0, %cst {dimension_numbers = #tpu.dot_dimension_numbers<[1], [0], [0], [1], [0, 0, 1, 1], [], []>} : vector<32x8xf32>, vector<8x128xf32>, vector<32x128xf32> -> vector<32x128xf32>
    %8 = vector.broadcast %3 : vector<32x1xf32> to vector<32x128xf32>
    %9 = arith.addf %7, %8 : vector<32x128xf32>
    %10 = math.tanh %9 : vector<32x128xf32>
    %cst_8 = arith.constant dense<0.000000e+00> : vector<32x128xf32>
    %11 = tpu.matmul %2, %10, %cst_8 {dimension_numbers = #tpu.dot_dimension_numbers<[1], [0], [0], [1], [0, 0, 1, 1], [], []>} : vector<32x32xf32>, vector<32x128xf32>, vector<32x128xf32> -> vector<32x128xf32>
    %12 = vector.broadcast %4 : vector<32x1xf32> to vector<32x128xf32>
    %13 = arith.addf %11, %12 : vector<32x128xf32>
    %14 = math.tanh %13 : vector<32x128xf32>
    %15 = vector.broadcast %5 : vector<32x1xf32> to vector<32x128xf32>
    %16 = arith.mulf %15, %14 : vector<32x128xf32>
    %cst_9 = arith.constant dense<0.000000e+00> : vector<128xf32>
    %17 = vector.multi_reduction <add>, %16, %cst_9 [0] : vector<32x128xf32> to vector<128xf32>
    %18 = vector.shape_cast %17 : vector<128xf32> to vector<1x128xf32>
    %19 = vector.broadcast %6 : vector<1x1xf32> to vector<1x128xf32>
    %20 = arith.addf %18, %19 : vector<1x128xf32>
    %21 = vector.shape_cast %20 : vector<1x128xf32> to vector<1x128xf32>
    %22 = vector.broadcast %21 : vector<1x128xf32> to vector<8x128xf32>
    %c0_10 = arith.constant 0 : index
    %c0_11 = arith.constant 0 : index
    %23 = vector.load %arg3[%c0_10, %c0_11] : memref<8x128xf32, #tpu.memory_space<vmem>>, vector<8x128xf32>
    tpu.vector_store %arg3[%c0_10, %c0_11], %22 {strides = array<i32>} : memref<8x128xf32, #tpu.memory_space<vmem>>, vector<8x128xf32>,
    return
  }
  func.func @transform_0(%arg0: i32) -> (i32, i32) {
    %c0_i32 = arith.constant 0 : i32
    %c0_i32_0 = arith.constant 0 : i32
    return %c0_i32, %arg0 : i32, i32
  }
  func.func @transform_1(%arg0: i32) -> (i32, i32) {
    %c0_i32 = arith.constant 0 : i32
    %c0_i32_0 = arith.constant 0 : i32
    %c0_i32_1 = arith.constant 0 : i32
    return %c0_i32, %c0_i32_0 : i32, i32
  }
  func.func @transform_2(%arg0: i32) -> (i32, i32) {
    %c0_i32 = arith.constant 0 : i32
    %c0_i32_0 = arith.constant 0 : i32
    return %c0_i32, %arg0 : i32, i32
  }
}

</mosaic_0001>

<llo_original>
// kernel: critic_forward.1
$region0: #{critic_forward.1}
  #allocation0 [shape = 'u32[]', space=smem, size = 0x4, offset = 0x4, fixed_abs, tag = 'smem constant byte address 0x4 - core index']
  #allocation1 [shape = 'u32[144,128]{1,0:T(1,128)}', space=vmem, size = 0x12000, scoped, tag = 'internal scratch']
  %s0 = inlined_call_operand.vmem [shape: f32[8,128], index: 0, kind: input, shape index: {}]
  %s1 = inlined_call_operand.hbm [shape: f32[96,128], index: 1, kind: input, shape index: {}]
  %s2 = inlined_call_operand.vmem [shape: f32[8,128], index: 2, kind: output, shape index: {}]
  %s3 = sld [smem:[#allocation0]]
  $region22: #{critic_forward.1} parent=0
    _
  %s5 = ssub.s32 1, %s3
  %s6 = scalar_select 0, %s5, %s3
  $region1: #{critic_forward.1} parent=0
    #allocation2 [shape = 'u8[49152]{0}', space=vmem, size = 0xc000, scoped, tag = 'input window, operand 1, single buffered']
    #allocation3 [shape = 's32[1]{0}', space=sflag, size = 0x4, scoped, tag = 'scoped memory for critic_forward.1']
    %7 = vsyncpa [#allocation3], 0
    // Predicated region
    $region2: #{critic_forward.1} parent=1 // pred_check
      _
    $region3: #{critic_forward.1} parent=1 // pred_check_branch
      %9 = sbr.rel (0) target = $region5
    $region4: #{critic_forward.1} parent=1 // pred_region
      _
    $region5: #{critic_forward.1} parent=1 // pred_fallthru
      _
    // Predicated region
    $region6: #{critic_forward.1} parent=1 // pred_check
      _
    $region7: #{critic_forward.1} parent=1 // pred_check_branch
      %11 = sbr.rel (0) target = $region9
    $region8: #{critic_forward.1} parent=1 // pred_region
      %s13 = ssub.s32 1536, 1536
      %14 = vsyncadd [#allocation3], %s13
      %s15 = sshll.u32 [#allocation2], 4
      %s16 = int_to_ptr.vmem [resolvable:$true] %s15
      %21 = dma.hbm_to_vmem [thread:$0]  %s1, 1536, %s16, [#allocation3], 128, 128, 8
    $region9: #{critic_forward.1} parent=1 // pred_fallthru
      _
    // Predicated region
    $region10: #{critic_forward.1} parent=1 // pred_check
      _
    $region11: #{critic_forward.1} parent=1 // pred_check_branch
      %23 = sbr.rel (0) target = $region13
    $region12: #{critic_forward.1} parent=1 // pred_region
      %24 = dma.done [#allocation3], 1536
    $region13: #{critic_forward.1} parent=1 // pred_fallthru
      _
    %v25 = vld [vmem:[%s0] sm:$0xff]
    %v26 = vld [vmem:[#allocation2] sm:$0xff]
    %v27 = vld [vmem:[#allocation2 + $0x8] sm:$0xff]
    %v28 = vld [vmem:[#allocation2 + $0x10] sm:$0xff]
    %v29 = vld [vmem:[#allocation2 + $0x18] sm:$0xff]
    %v30 = vld [vmem:[#allocation2 + $0x20] sm:$0xff]
    %v31 = vld [vmem:[#allocation2 + $0x28] sm:$0xff]
    %v32 = vld [vmem:[#allocation2 + $0x30] sm:$0xff]
    %v33 = vld [vmem:[#allocation2 + $0x38] sm:$0xff]
    %v34 = vld [vmem:[#allocation2 + $0x40] sm:$0xff]
    %v35 = vld [vmem:[#allocation2 + $0x48] sm:$0xff]
    %v36 = vld [vmem:[#allocation2 + $0x50] sm:$0xff]
    %v37 = vld [vmem:[#allocation2 + $0x58] sm:$0xff]
    %v38 = vld [vmem:[#allocation2 + $0x40] sm:$0x1]
    %40 = vset.pattern.permute.xlu0 0
    %41 = vperm.xlu0 %40, %v34
    %v42 = vpop.permute.xlu0 %41
    %45 = vset.pattern.permute.xlu0 0
    %46 = vperm.xlu0 %45, %v35
    %v47 = vpop.permute.xlu0 %46
    %50 = vset.pattern.permute.xlu0 0
    %51 = vperm.xlu0 %50, %v36
    %v52 = vpop.permute.xlu0 %51
    %55 = vset.pattern.permute.xlu0 0
    %56 = vperm.xlu0 %55, %v37
    %v57 = vpop.permute.xlu0 %56
    %vm59 = vcmask 64512
    %v61 = vsel %vm59, %v26, 0
    %v64 = vsel %vm59, %v27, 0
    %v67 = vsel %vm59, %v28, 0
    %v70 = vsel %vm59, %v29, 0
    %72 = vmatprep.subr.mxu0 0.0
    %73 = vmatpush1.msra.mxu0 %v25
    %74 = vmatprep.subr.mxu0 0.0
    %75 = vmatpush1.msra.mxu0 0.0
    %76 = vmatprep.subr.mxu0 0.0
    %77 = vmatpush1.msra.mxu0 0.0
    %78 = vmatprep.subr.mxu0 0.0
    %79 = vmatpush1.msra.mxu0 0.0
    %80 = vmatprep.subr.mxu0 0.0
    %81 = vmatpush1.msra.mxu0 0.0
    %82 = vmatprep.subr.mxu0 0.0
    %83 = vmatpush1.msra.mxu0 0.0
    %84 = vmatprep.subr.mxu0 0.0
    %85 = vmatpush1.msra.mxu0 0.0
    %86 = vmatprep.subr.mxu0 0.0
    %87 = vmatpush1.msra.mxu0 0.0
    %88 = vmatprep.subr.mxu0 0.0
    %89 = vmatpush1.msra.mxu0 0.0
    %90 = vmatprep.subr.mxu0 0.0
    %91 = vmatpush1.msra.mxu0 0.0
    %92 = vmatprep.subr.mxu0 0.0
    %93 = vmatpush1.msra.mxu0 0.0
    %94 = vmatprep.subr.mxu0 0.0
    %95 = vmatpush1.msra.mxu0 0.0
    %96 = vmatprep.subr.mxu0 0.0
    %97 = vmatpush1.msra.mxu0 0.0
    %98 = vmatprep.subr.mxu0 0.0
    %99 = vmatpush1.msra.mxu0 0.0
    %100 = vmatprep.subr.mxu0 0.0
    %101 = vmatpush1.msra.mxu0 0.0
    %102 = vmatprep.subr.mxu0 0.0
    %103 = vmatpush1.msra.mxu0 0.0
    %104 = vmatprep.subr.mxu0 0.0
    %105 = vmatpush1.msra.mxu0 0.0
    %106 = vmatprep.subr.mxu0 0.0
    %107 = vmatpush1.msra.mxu0 0.0
    %108 = vmatprep.subr.mxu0 0.0
    %109 = vmatpush1.msra.mxu0 0.0
    %110 = vmatprep.subr.mxu0 0.0
    %111 = vmatpush1.msra.mxu0 0.0
    %112 = vmatprep.subr.mxu0 0.0
    %113 = vmatpush1.msra.mxu0 0.0
    %114 = vmatprep.subr.mxu0 0.0
    %115 = vmatpush1.msra.mxu0 0.0
    %116 = vmatprep.subr.mxu0 0.0
    %117 = vmatpush1.msra.mxu0 0.0
    %118 = vmatprep.subr.mxu0 0.0
    %119 = vmatpush1.msra.mxu0 0.0
    %120 = vmatprep.subr.mxu0 0.0
    %121 = vmatpush1.msra.mxu0 0.0
    %122 = vmatprep.subr.mxu0 0.0
    %123 = vmatpush1.msra.mxu0 0.0
    %124 = vmatprep.subr.mxu0 0.0
    %125 = vmatpush1.msra.mxu0 0.0
    %126 = vmatprep.subr.mxu0 0.0
    %127 = vmatpush1.msra.mxu0 0.0
    %128 = vmatprep.subr.mxu0 0.0
    %129 = vmatpush1.msra.mxu0 0.0
    %130 = vmatprep.subr.mxu0 0.0
    %131 = vmatpush1.msra.mxu0 0.0
    %132 = vmatprep.subr.mxu0 0.0
    %133 = vmatpush1.msra.mxu0 0.0
    %134 = vmatprep.subr.mxu0 0.0
    %135 = vmatpush1.msra.mxu0 0.0
    %136 = vmatprep.mubr.f32.mxu0 0.0
    %137 = vmatmul.mubr.f32.gmra.mrb[0].mxu0 %v61
    %v138 = vpop.f32.mrb[0].mxu0
    %v139 = vadd.f32 %v42, %v138
    %v140 = vpop.f32.mrb[0].mxu0
    %141 = vmatprep.mubr.f32.mxu0 0.0
    %142 = vmatmul.mubr.f32.gmra.mrb[0].mxu0 %v64
    %v143 = vpop.f32.mrb[0].mxu0
    %v144 = vadd.f32 %v47, %v143
    %v145 = vpop.f32.mrb[0].mxu0
    %146 = vmatprep.mubr.f32.mxu0 0.0
    %147 = vmatmul.mubr.f32.gmra.mrb[0].mxu0 %v67
    %v148 = vpop.f32.mrb[0].mxu0
    %v149 = vadd.f32 %v52, %v148
    %v150 = vpop.f32.mrb[0].mxu0
    %151 = vmatprep.mubr.f32.mxu0 0.0
    %152 = vmatmul.mubr.f32.gmra.mrb[0].mxu0 %v70
    %v153 = vpop.f32.mrb[0].mxu0
    %v154 = vadd.f32 %v57, %v153
    %v155 = vpop.f32.mrb[0].mxu0
    %156 = vdwg.mxu0
    %v157 = vtanh.pop %v139
    %v158 = vtanh.pop %v144
    %v159 = vtanh.pop %v149
    %v160 = vtanh.pop %v154
    %161 = vset.pattern.permute.xlu0 1
    %162 = vperm.xlu0 %161, %v34
    %v163 = vpop.permute.xlu0 %162
    %165 = vset.pattern.permute.xlu0 1
    %166 = vperm.xlu0 %165, %v35
    %v167 = vpop.permute.xlu0 %166
    %169 = vset.pattern.permute.xlu0 1
    %170 = vperm.xlu0 %169, %v36
    %v171 = vpop.permute.xlu0 %170
    %173 = vset.pattern.permute.xlu0 1
    %174 = vperm.xlu0 %173, %v37
    %v175 = vpop.permute.xlu0 %174
    %vm177 = vcmask 261120
    %v179 = vsel %vm177, %v30, 0
    %v182 = vsel %vm177, %v31, 0
    %v185 = vsel %vm177, %v32, 0
    %v188 = vsel %vm177, %v33, 0
    %190 = vmatprep.subr.mxu0 0.0
    %191 = vmatpush1.msra.mxu0 %v157
    %192 = vmatprep.subr.mxu0 0.0
    %193 = vmatpush1.msra.mxu0 %v158
    %194 = vmatprep.subr.mxu0 0.0
    %195 = vmatpush1.msra.mxu0 %v159
    %196 = vmatprep.subr.mxu0 0.0
    %197 = vmatpush1.msra.mxu0 %v160
    %198 = vmatprep.subr.mxu0 0.0
    %199 = vmatpush1.msra.mxu0 0.0
    %200 = vmatprep.subr.mxu0 0.0
    %201 = vmatpush1.msra.mxu0 0.0
    %202 = vmatprep.subr.mxu0 0.0
    %203 = vmatpush1.msra.mxu0 0.0
    %204 = vmatprep.subr.mxu0 0.0
    %205 = vmatpush1.msra.mxu0 0.0
    %206 = vmatprep.subr.mxu0 0.0
    %207 = vmatpush1.msra.mxu0 0.0
    %208 = vmatprep.subr.mxu0 0.0
    %209 = vmatpush1.msra.mxu0 0.0
    %210 = vmatprep.subr.mxu0 0.0
    %211 = vmatpush1.msra.mxu0 0.0
    %212 = vmatprep.subr.mxu0 0.0
    %213 = vmatpush1.msra.mxu0 0.0
    %214 = vmatprep.subr.mxu0 0.0
    %215 = vmatpush1.msra.mxu0 0.0
    %216 = vmatprep.subr.mxu0 0.0
    %217 = vmatpush1.msra.mxu0 0.0
    %218 = vmatprep.subr.mxu0 0.0
    %219 = vmatpush1.msra.mxu0 0.0
    %220 = vmatprep.subr.mxu0 0.0
    %221 = vmatpush1.msra.mxu0 0.0
    %222 = vmatprep.subr.mxu0 0.0
    %223 = vmatpush1.msra.mxu0 0.0
    %224 = vmatprep.subr.mxu0 0.0
    %225 = vmatpush1.msra.mxu0 0.0
    %226 = vmatprep.subr.mxu0 0.0
    %227 = vmatpush1.msra.mxu0 0.0
    %228 = vmatprep.subr.mxu0 0.0
    %229 = vmatpush1.msra.mxu0 0.0
    %230 = vmatprep.subr.mxu0 0.0
    %231 = vmatpush1.msra.mxu0 0.0
    %232 = vmatprep.subr.mxu0 0.0
    %233 = vmatpush1.msra.mxu0 0.0
    %234 = vmatprep.subr.mxu0 0.0
    %235 = vmatpush1.msra.mxu0 0.0
    %236 = vmatprep.subr.mxu0 0.0
    %237 = vmatpush1.msra.mxu0 0.0
    %238 = vmatprep.subr.mxu0 0.0
    %239 = vmatpush1.msra.mxu0 0.0
    %240 = vmatprep.subr.mxu0 0.0
    %241 = vmatpush1.msra.mxu0 0.0
    %242 = vmatprep.subr.mxu0 0.0
    %243 = vmatpush1.msra.mxu0 0.0
    %244 = vmatprep.subr.mxu0 0.0
    %245 = vmatpush1.msra.mxu0 0.0
    %246 = vmatprep.subr.mxu0 0.0
    %247 = vmatpush1.msra.mxu0 0.0
    %248 = vmatprep.subr.mxu0 0.0
    %249 = vmatpush1.msra.mxu0 0.0
    %250 = vmatprep.subr.mxu0 0.0
    %251 = vmatpush1.msra.mxu0 0.0
    %252 = vmatprep.subr.mxu0 0.0
    %253 = vmatpush1.msra.mxu0 0.0
    %254 = vmatprep.mubr.f32.mxu0 0.0
    %255 = vmatmul.mubr.f32.gmra.mrb[0].mxu0 %v179
    %v256 = vpop.f32.mrb[0].mxu0
    %v257 = vadd.f32 %v163, %v256
    %v258 = vpop.f32.mrb[0].mxu0
    %259 = vmatprep.mubr.f32.mxu0 0.0
    %260 = vmatmul.mubr.f32.gmra.mrb[0].mxu0 %v182
    %v261 = vpop.f32.mrb[0].mxu0
    %v262 = vadd.f32 %v167, %v261
    %v263 = vpop.f32.mrb[0].mxu0
    %264 = vmatprep.mubr.f32.mxu0 0.0
    %265 = vmatmul.mubr.f32.gmra.mrb[0].mxu0 %v185
    %v266 = vpop.f32.mrb[0].mxu0
    %v267 = vadd.f32 %v171, %v266
    %v268 = vpop.f32.mrb[0].mxu0
    %269 = vmatprep.mubr.f32.mxu0 0.0
    %270 = vmatmul.mubr.f32.gmra.mrb[0].mxu0 %v188
    %v271 = vpop.f32.mrb[0].mxu0
    %v272 = vadd.f32 %v175, %v271
    %v273 = vpop.f32.mrb[0].mxu0
    %274 = vdwg.mxu0
    %v275 = vtanh.pop %v257
    %v276 = vtanh.pop %v262
    %v277 = vtanh.pop %v267
    %v278 = vtanh.pop %v272
    %279 = vset.pattern.permute.xlu0 2
    %280 = vperm.xlu0 %279, %v34
    %v281 = vpop.permute.xlu0 %280
    %283 = vset.pattern.permute.xlu0 2
    %284 = vperm.xlu0 %283, %v35
    %v285 = vpop.permute.xlu0 %284
    %287 = vset.pattern.permute.xlu0 2
    %288 = vperm.xlu0 %287, %v36
    %v289 = vpop.permute.xlu0 %288
    %291 = vset.pattern.permute.xlu0 2
    %292 = vperm.xlu0 %291, %v37
    %v293 = vpop.permute.xlu0 %292
    %v295 = vmul.f32 %v281, %v275
    %v296 = vmul.f32 %v285, %v276
    %v297 = vmul.f32 %v289, %v277
    %v298 = vmul.f32 %v293, %v278
    %v299 = vadd.f32 %v295, %v296
    %v300 = vadd.f32 %v299, %v297
    %v301 = vadd.f32 %v300, %v298
    %v302 = vrot.slane %v301, 4
    %v303 = vadd.f32 %v301, %v302
    %v304 = vrot.slane %v303, 2
    %v305 = vadd.f32 %v303, %v304
    %v306 = vrot.slane %v305, 1
    %v307 = vadd.f32 %v305, %v306
    %309 = vset.pattern.permute.xlu0 3
    %310 = vperm.xlu0 %309, %v38
    %v311 = vpop.permute.xlu0 %310
    %v313 = vadd.f32 %v307, %v311
    %v314 = vlaneseq
    %v315 = vshrl.u32 %v314, 7
    %v316 = vsub.s32 0, %v315
    %v317 = vrot.slane %v313, %v316
    %318 = vst [vmem:[%s2] sm:$0xff] %v317
    // Predicated region
    $region14: #{critic_forward.1} parent=1 // pred_check
      _
    $region15: #{critic_forward.1} parent=1 // pred_check_branch
      %320 = sbr.rel (0) target = $region17
    $region16: #{critic_forward.1} parent=1 // pred_region
      _
    $region17: #{critic_forward.1} parent=1 // pred_fallthru
      _
    // Predicated region
    $region18: #{critic_forward.1} parent=1 // pred_check
      _
    $region19: #{critic_forward.1} parent=1 // pred_check_branch
      %322 = sbr.rel (0) target = $region21
    $region20: #{critic_forward.1} parent=1 // pred_region
      _
    $region21: #{critic_forward.1} parent=1 // pred_fallthru
      _
    %323 = vsyncpa [#allocation3], 1

</llo_original>
